<compile_context>
chip_gen: v7x
topology: tpu7x:2x2x1
jax: 0.10.0
libtpu: 0.0.40
codegen_flags: <defaults>
</compile_context>

<pallas_src>
import functools

import jax
import jax.numpy as jnp
import numpy as np
from jax.experimental import pallas as pl
from jax.experimental.pallas import tpu as pltpu


def _feature_fun_max_kernel(x_ref, whole_w_ref, end_w_ref, relay_w_ref,
                            bias_ref, out_ref, *, T, L):
    """One batch element per grid step.

    x_ref:    (1, H, Tp)   logits, transposed (time on lanes), zero padded
    whole_w:  (L, H)
    end_w:    (1, H)       end_fc.weight
    relay_w:  (1, H)       relay_fc.weight
    bias:     (L + 1, 1)   [length_bias; relay_fc.bias]
    out_ref:  (1, L+1, Tp) rows 0..L-1 = whole + end + length_bias, row L = relay
    """
    x = x_ref[0].astype(jnp.float32)                      # (H, Tp)
    H, Tp = x.shape
    whole_w = whole_w_ref[...].astype(jnp.float32)        # (L, H)
    end_w = end_w_ref[...].astype(jnp.float32)            # (1, H)
    relay_w = relay_w_ref[...].astype(jnp.float32)        # (1, H)

    t_ids = jax.lax.broadcasted_iota(jnp.int32, (H, Tp), 1)

    # l == 0 segment score (max(x, x) == x) and end_fc both contract the
    # unshifted x: fuse into one MXU matmul.
    w0 = jnp.concatenate([whole_w[0:1, :], end_w], axis=0)         # (2, H)
    base = jnp.dot(w0, x, preferred_element_type=jnp.float32)      # (2, Tp)
    end = base[1:2, :]                                             # (1, Tp)
    rows = [base[0:1, :]]

    # Segments ending at t with length l+1: max(x[:, t], x[:, t-l]) with
    # zero padding for t < l, contracted against whole_w[l] on the MXU.
    for l in range(1, L):
        rolled = pltpu.roll(x, shift=l % Tp, axis=1)     # rolled[:, t] = x[:, (t-l) mod Tp]
        shifted = jnp.where(t_ids >= l, rolled, 0.0)     # zero-pad semantics (guards l >= T too)
        m = jnp.maximum(x, shifted)                      # (H, Tp)
        rows.append(jnp.dot(whole_w[l:l + 1, :], m,
                            preferred_element_type=jnp.float32))   # (1, Tp)

    whole = jnp.concatenate(rows, axis=0) + end                    # (L, Tp)

    # Relay score: max(x[:, t], x[:, t+L]) with zero padding past the true T.
    fwd = pltpu.roll(x, shift=(-L) % Tp, axis=1)         # fwd[:, t] = x[:, (t+L) mod Tp]
    fwd = jnp.where(t_ids < T - L, fwd, 0.0)
    relay_max = jnp.maximum(x, fwd)
    relay = jnp.dot(relay_w, relay_max,
                    preferred_element_type=jnp.float32)            # (1, Tp)

    scores = jnp.concatenate([whole, relay], axis=0)               # (L+1, Tp)
    out_ref[0] = (scores + bias_ref[...].astype(jnp.float32)).astype(out_ref.dtype)


def feature_fun_max(logits, whole_w, end_w, relay_w, relay_b, length_bias):
    """logits: (B, T, H) -> (whole_scores (B, T, L), relay_scores (B, T))."""
    B, T, H = logits.shape
    L = whole_w.shape[0]
    Tp = ((T + 127) // 128) * 128            # lane-dense time axis

    # Transpose (XLA transpose outside the kernel) + zero pad time to Tp.
    x = jnp.transpose(logits, (0, 2, 1))                  # (B, H, T)
    if Tp != T:
        x = jnp.pad(x, ((0, 0), (0, 0), (0, Tp - T)))     # (B, H, Tp)

    bias = jnp.concatenate(
        [length_bias.reshape(-1), relay_b.reshape(-1)]).reshape(L + 1, 1)
    bias = bias.astype(logits.dtype)

    kernel = functools.partial(_feature_fun_max_kernel, T=T, L=L)

    # TODO(synk): for very long sequences add a T-tile grid axis with an
    # L-column leading/trailing halo and set vmem_limit_bytes (v7x 64 MiB /
    # v5e 16 MiB scoped budgets); full-T blocks easily fit for CWS shapes.
    out = pl.pallas_call(
        kernel,
        grid=(B,),
        in_specs=[
            pl.BlockSpec((1, H, Tp), lambda b: (b, 0, 0)),   # logits (transposed)
            pl.BlockSpec((L, H), lambda b: (0, 0)),          # whole_w
            pl.BlockSpec((1, H), lambda b: (0, 0)),          # end_fc.weight
            pl.BlockSpec((1, H), lambda b: (0, 0)),          # relay_fc.weight
            pl.BlockSpec((L + 1, 1), lambda b: (0, 0)),      # [length_bias; relay_b]
        ],
        out_specs=pl.BlockSpec((1, L + 1, Tp), lambda b: (b, 0, 0)),
        out_shape=jax.ShapeDtypeStruct((B, L + 1, Tp), logits.dtype),
        compiler_params=pltpu.CompilerParams(
            dimension_semantics=("parallel",)),
    )(x, whole_w, end_w, relay_w, bias)

    whole_scores = jnp.transpose(out[:, :L, :T], (0, 2, 1))   # (B, T, L)
    relay_scores = out[:, L, :T]                              # (B, T)
    return whole_scores, relay_scores


def _reference(logits, whole_w, end_w, relay_w, relay_b, length_bias):
    """Pure-JAX transcription of the PyTorch forward for validation."""
    B, T, H = logits.shape
    L = whole_w.shape[0]
    # start_logits[b, t, l] = logits[b, t - l] (zero for t - l < 0)
    start = jnp.stack(
        [jnp.pad(logits, ((0, 0), (l, 0), (0, 0)))[:, :T] for l in range(L)],
        axis=2)                                              # (B, T, L, H)
    logits_max = jnp.maximum(logits[:, :, None, :], start)
    whole = jnp.einsum('btlh,lh->btl', logits_max, whole_w)
    end = jnp.einsum('bth,h->bt', logits, end_w[0])[..., None]
    out1 = whole + end + length_bias[None, None, :]
    fwd = jnp.concatenate(
        [logits[:, L:], jnp.zeros((B, L, H), logits.dtype)], axis=1)[:, :T]
    relay_max = jnp.maximum(logits, fwd)
    relay = jnp.einsum('bth,h->bt', relay_max, relay_w[0]) + relay_b[0]
    return out1, relay


if __name__ == "__main__":
    B, T, H, L = 2, 8, 32, 4
    key = jax.random.PRNGKey(0)
    kx, kw, ke, kr, kb, kl = jax.random.split(key, 6)

    logits = jax.random.normal(kx, (B, T, H), dtype=jnp.float32)
    # Deterministic synthetic parameters (shapes from the module's __init__):
    whole_w = jax.random.normal(kw, (L, H), dtype=jnp.float32)       # whole_w
    end_w = jax.random.normal(ke, (1, H), dtype=jnp.float32)         # end_fc.weight
    relay_w = jax.random.normal(kr, (1, H), dtype=jnp.float32)       # relay_fc.weight
    relay_b = jax.random.normal(kb, (1,), dtype=jnp.float32)         # relay_fc.bias
    length_bias = jax.random.normal(kl, (L,), dtype=jnp.float32)     # length_bias

    whole_scores, relay_scores = feature_fun_max(
        logits, whole_w, end_w, relay_w, relay_b, length_bias)
    jax.block_until_ready((whole_scores, relay_scores))

    ref_whole, ref_relay = _reference(
        logits, whole_w, end_w, relay_w, relay_b, length_bias)
    np.testing.assert_allclose(np.asarray(whole_scores), np.asarray(ref_whole),
                               rtol=1e-5, atol=1e-5)
    np.testing.assert_allclose(np.asarray(relay_scores), np.asarray(ref_relay),
                               rtol=1e-5, atol=1e-5)
    print("KERNEL_OK")
</pallas_src>

<mosaic_0001>
module attributes {stable_mosaic.version = 11 : i64} {
  func.func @_feature_fun_max_kernel(%arg0: i32, %arg1: memref<1x32x128xf32, #tpu.memory_space<vmem>>, %arg2: memref<4x32xf32, #tpu.memory_space<vmem>>, %arg3: memref<1x32xf32, #tpu.memory_space<vmem>>, %arg4: memref<1x32xf32, #tpu.memory_space<vmem>>, %arg5: memref<5x1xf32, #tpu.memory_space<vmem>>, %arg6: memref<1x5x128xf32, #tpu.memory_space<vmem>>) attributes {dimension_semantics = [#tpu.dimension_semantics<parallel>], iteration_bounds = array<i64: 2>, scalar_prefetch = 0 : i64, scratch_operands = 0 : i64, tpu.core_type = #tpu.core_type<tc>, window_params = [{transform_indices = @transform_0, window_bounds = array<i64: 1, 32, 128>}, {pipeline_mode = #tpu.pipeline_mode<synchronous>, transform_indices = @transform_1, window_bounds = array<i64: 4, 32>}, {pipeline_mode = #tpu.pipeline_mode<synchronous>, transform_indices = @transform_2, window_bounds = array<i64: 1, 32>}, {pipeline_mode = #tpu.pipeline_mode<synchronous>, transform_indices = @transform_3, window_bounds = array<i64: 1, 32>}, {pipeline_mode = #tpu.pipeline_mode<synchronous>, transform_indices = @transform_4, window_bounds = array<i64: 5, 1>}, {transform_indices = @transform_5, window_bounds = array<i64: 1, 5, 128>}]} {
    %c0 = arith.constant 0 : index
    %c0_0 = arith.constant 0 : index
    %c0_1 = arith.constant 0 : index
    %0 = vector.load %arg1[%c0, %c0_0, %c0_1] : memref<1x32x128xf32, #tpu.memory_space<vmem>>, vector<1x32x128xf32>
    %1 = vector.shape_cast %0 : vector<1x32x128xf32> to vector<32x128xf32>
    %c0_2 = arith.constant 0 : index
    %c0_3 = arith.constant 0 : index
    %2 = vector.load %arg2[%c0_2, %c0_3] : memref<4x32xf32, #tpu.memory_space<vmem>>, vector<4x32xf32>
    %c0_4 = arith.constant 0 : index
    %c0_5 = arith.constant 0 : index
    %3 = vector.load %arg3[%c0_4, %c0_5] : memref<1x32xf32, #tpu.memory_space<vmem>>, vector<1x32xf32>
    %c0_6 = arith.constant 0 : index
    %c0_7 = arith.constant 0 : index
    %4 = vector.load %arg4[%c0_6, %c0_7] : memref<1x32xf32, #tpu.memory_space<vmem>>, vector<1x32xf32>
    %5 = tpu.iota {dimensions = array<i32: 1>} : vector<32x128xi32>
    %6 = vector.extract_strided_slice %2 {offsets = [0, 0], sizes = [1, 32], strides = [1, 1]} : vector<4x32xf32> to vector<1x32xf32>
    %7 = tpu.concatenate %6, %3 in 0 : vector<1x32xf32>, vector<1x32xf32> -> vector<2x32xf32>
    %cst = arith.constant dense<0.000000e+00> : vector<2x128xf32>
    %8 = tpu.matmul %7, %1, %cst {dimension_numbers = #tpu.dot_dimension_numbers<[1], [0], [0], [1], [0, 0, 1, 1], [], []>} : vector<2x32xf32>, vector<32x128xf32>, vector<2x128xf32> -> vector<2x128xf32>
    %9 = vector.extract_strided_slice %8 {offsets = [1, 0], sizes = [1, 128], strides = [1, 1]} : vector<2x128xf32> to vector<1x128xf32>
    %10 = vector.extract_strided_slice %8 {offsets = [0, 0], sizes = [1, 128], strides = [1, 1]} : vector<2x128xf32> to vector<1x128xf32>
    %c1_i32 = arith.constant 1 : i32
    %11 = tpu.dynamic_rotate %1 by %c1_i32 dim 1 : vector<32x128xf32>, i32 -> vector<32x128xf32>
    %c1_i32_8 = arith.constant 1 : i32
    %12 = vector.broadcast %c1_i32_8 : i32 to vector<32x128xi32>
    %13 = arith.cmpi sge, %5, %12 : vector<32x128xi32>
    %cst_9 = arith.constant 0.000000e+00 : f32
    %14 = vector.broadcast %cst_9 : f32 to vector<32x128xf32>
    %15 = arith.select %13, %11, %14 : vector<32x128xi1>, vector<32x128xf32>
    %16 = arith.maximumf %1, %15 : vector<32x128xf32>
    %17 = vector.extract_strided_slice %2 {offsets = [1, 0], sizes = [1, 32], strides = [1, 1]} : vector<4x32xf32> to vector<1x32xf32>
    %cst_10 = arith.constant dense<0.000000e+00> : vector<1x128xf32>
    %18 = tpu.matmul %17, %16, %cst_10 {dimension_numbers = #tpu.dot_dimension_numbers<[1], [0], [0], [1], [0, 0, 1, 1], [], []>} : vector<1x32xf32>, vector<32x128xf32>, vector<1x128xf32> -> vector<1x128xf32>
    %c2_i32 = arith.constant 2 : i32
    %19 = tpu.dynamic_rotate %1 by %c2_i32 dim 1 : vector<32x128xf32>, i32 -> vector<32x128xf32>
    %c2_i32_11 = arith.constant 2 : i32
    %20 = vector.broadcast %c2_i32_11 : i32 to vector<32x128xi32>
    %21 = arith.cmpi sge, %5, %20 : vector<32x128xi32>
    %cst_12 = arith.constant 0.000000e+00 : f32
    %22 = vector.broadcast %cst_12 : f32 to vector<32x128xf32>
    %23 = arith.select %21, %19, %22 : vector<32x128xi1>, vector<32x128xf32>
    %24 = arith.maximumf %1, %23 : vector<32x128xf32>
    %25 = vector.extract_strided_slice %2 {offsets = [2, 0], sizes = [1, 32], strides = [1, 1]} : vector<4x32xf32> to vector<1x32xf32>
    %cst_13 = arith.constant dense<0.000000e+00> : vector<1x128xf32>
    %26 = tpu.matmul %25, %24, %cst_13 {dimension_numbers = #tpu.dot_dimension_numbers<[1], [0], [0], [1], [0, 0, 1, 1], [], []>} : vector<1x32xf32>, vector<32x128xf32>, vector<1x128xf32> -> vector<1x128xf32>
    %c3_i32 = arith.constant 3 : i32
    %27 = tpu.dynamic_rotate %1 by %c3_i32 dim 1 : vector<32x128xf32>, i32 -> vector<32x128xf32>
    %c3_i32_14 = arith.constant 3 : i32
    %28 = vector.broadcast %c3_i32_14 : i32 to vector<32x128xi32>
    %29 = arith.cmpi sge, %5, %28 : vector<32x128xi32>
    %cst_15 = arith.constant 0.000000e+00 : f32
    %30 = vector.broadcast %cst_15 : f32 to vector<32x128xf32>
    %31 = arith.select %29, %27, %30 : vector<32x128xi1>, vector<32x128xf32>
    %32 = arith.maximumf %1, %31 : vector<32x128xf32>
    %33 = vector.extract_strided_slice %2 {offsets = [3, 0], sizes = [1, 32], strides = [1, 1]} : vector<4x32xf32> to vector<1x32xf32>
    %cst_16 = arith.constant dense<0.000000e+00> : vector<1x128xf32>
    %34 = tpu.matmul %33, %32, %cst_16 {dimension_numbers = #tpu.dot_dimension_numbers<[1], [0], [0], [1], [0, 0, 1, 1], [], []>} : vector<1x32xf32>, vector<32x128xf32>, vector<1x128xf32> -> vector<1x128xf32>
    %35 = tpu.concatenate %10, %18, %26, %34 in 0 : vector<1x128xf32>, vector<1x128xf32>, vector<1x128xf32>, vector<1x128xf32> -> vector<4x128xf32>
    %36 = vector.broadcast %9 : vector<1x128xf32> to vector<4x128xf32>
    %37 = arith.addf %35, %36 : vector<4x128xf32>
    %c124_i32 = arith.constant 124 : i32
    %38 = tpu.dynamic_rotate %1 by %c124_i32 dim 1 : vector<32x128xf32>, i32 -> vector<32x128xf32>
    %c4_i32 = arith.constant 4 : i32
    %39 = vector.broadcast %c4_i32 : i32 to vector<32x128xi32>
    %40 = arith.cmpi slt, %5, %39 : vector<32x128xi32>
    %cst_17 = arith.constant 0.000000e+00 : f32
    %41 = vector.broadcast %cst_17 : f32 to vector<32x128xf32>
    %42 = arith.select %40, %38, %41 : vector<32x128xi1>, vector<32x128xf32>
    %43 = arith.maximumf %1, %42 : vector<32x128xf32>
    %cst_18 = arith.constant dense<0.000000e+00> : vector<1x128xf32>
    %44 = tpu.matmul %4, %43, %cst_18 {dimension_numbers = #tpu.dot_dimension_numbers<[1], [0], [0], [1], [0, 0, 1, 1], [], []>} : vector<1x32xf32>, vector<32x128xf32>, vector<1x128xf32> -> vector<1x128xf32>
    %45 = tpu.concatenate %37, %44 in 0 : vector<4x128xf32>, vector<1x128xf32> -> vector<5x128xf32>
    %c0_19 = arith.constant 0 : index
    %c0_20 = arith.constant 0 : index
    %46 = vector.load %arg5[%c0_19, %c0_20] : memref<5x1xf32, #tpu.memory_space<vmem>>, vector<5x1xf32>
    %47 = vector.broadcast %46 : vector<5x1xf32> to vector<5x128xf32>
    %48 = arith.addf %45, %47 : vector<5x128xf32>
    %c0_21 = arith.constant 0 : index
    %c0_22 = arith.constant 0 : index
    %c0_23 = arith.constant 0 : index
    %49 = vector.load %arg6[%c0_21, %c0_22, %c0_23] : memref<1x5x128xf32, #tpu.memory_space<vmem>>, vector<1x5x128xf32>
    %50 = vector.shape_cast %49 : vector<1x5x128xf32> to vector<5x128xf32>
    %51 = vector.shape_cast %48 : vector<5x128xf32> to vector<1x5x128xf32>
    tpu.vector_store %arg6[%c0_21, %c0_22, %c0_23], %51 {strides = array<i32>} : memref<1x5x128xf32, #tpu.memory_space<vmem>>, vector<1x5x128xf32>,
    return
  }
  func.func @transform_0(%arg0: i32) -> (i32, i32, i32) {
    %c0_i32 = arith.constant 0 : i32
    %c0_i32_0 = arith.constant 0 : i32
    %c0_i32_1 = arith.constant 0 : i32
    return %arg0, %c0_i32, %c0_i32_0 : i32, i32, i32
  }
  func.func @transform_1(%arg0: i32) -> (i32, i32) {
    %c0_i32 = arith.constant 0 : i32
    %c0_i32_0 = arith.constant 0 : i32
    %c0_i32_1 = arith.constant 0 : i32
    return %c0_i32, %c0_i32_0 : i32, i32
  }
  func.func @transform_2(%arg0: i32) -> (i32, i32) {
    %c0_i32 = arith.constant 0 : i32
    %c0_i32_0 = arith.constant 0 : i32
    %c0_i32_1 = arith.constant 0 : i32
    return %c0_i32, %c0_i32_0 : i32, i32
  }
  func.func @transform_3(%arg0: i32) -> (i32, i32) {
    %c0_i32 = arith.constant 0 : i32
    %c0_i32_0 = arith.constant 0 : i32
    %c0_i32_1 = arith.constant 0 : i32
    return %c0_i32, %c0_i32_0 : i32, i32
  }
  func.func @transform_4(%arg0: i32) -> (i32, i32) {
    %c0_i32 = arith.constant 0 : i32
    %c0_i32_0 = arith.constant 0 : i32
    %c0_i32_1 = arith.constant 0 : i32
    return %c0_i32, %c0_i32_0 : i32, i32
  }
  func.func @transform_5(%arg0: i32) -> (i32, i32, i32) {
    %c0_i32 = arith.constant 0 : i32
    %c0_i32_0 = arith.constant 0 : i32
    %c0_i32_1 = arith.constant 0 : i32
    return %arg0, %c0_i32, %c0_i32_0 : i32, i32, i32
  }
}

</mosaic_0001>

<llo_original>
// kernel: tpu_custom_call.1
$region0: #{tpu_custom_call.1}
  #allocation0 [shape = 'u32[]', space=smem, size = 0x4, offset = 0x4, fixed_abs, tag = 'smem constant byte address 0x4 - core index']
  #allocation1 [shape = 'u32[144,128]{1,0:T(1,128)}', space=vmem, size = 0x12000, scoped, tag = 'internal scratch']
  %s0 = inlined_call_operand.hbm [shape: f32[2,32,128], index: 0, kind: input, shape index: {}]
  %s1 = inlined_call_operand.vmem [shape: f32[4,32], index: 1, kind: input, shape index: {}]
  %s2 = inlined_call_operand.vmem [shape: f32[1,32], index: 2, kind: input, shape index: {}]
  %s3 = inlined_call_operand.vmem [shape: f32[1,32], index: 3, kind: input, shape index: {}]
  %s4 = inlined_call_operand.vmem [shape: f32[5,1], index: 4, kind: input, shape index: {}]
  %s5 = inlined_call_operand.vmem [shape: f32[2,5,128], index: 5, kind: output, shape index: {}]
  %s6 = sld [smem:[#allocation0]]
  $region57: #{tpu_custom_call.1} parent=0
    _
  %s8 = ssub.s32 1, %s6
  %s9 = scalar_select 0, %s8, %s6
  $region1: #{tpu_custom_call.1} parent=0
    #allocation2 [shape = 'u8[32768]{0}', space=vmem, size = 0x8000, scoped, tag = 'input window, operand 0']
    #allocation3 [shape = 's32[2]{0}', space=sflag, size = 0x8, scoped, tag = 'scoped memory for tpu_custom_call.1']
    %10 = vsyncpa [#allocation3], 0
    %s11 = scalar_lea.sflag [#allocation3], 1
    %12 = vsyncpa %s11, 0
    loop: start=0, step=1, limit=4
    $region2: #{tpu_custom_call.1} parent=1 // loop_pre_header
      _
    $region3: #{tpu_custom_call.1} parent=1 // loop_header
      %s14 = sphi 0, %s18
      %p15 = scmp.ge.s32.totalorder %s14, 4
      %s24 = sphi 0, %s26
      %s27 = sphi 0, %s24
      %s28 = sphi 0, %s27
      %s44 = sphi 0, %s28
      %s48 = sphi 0, %s48
      %s50 = sphi 0, %s48
      %s51 = sphi 0, %s50
      %s65 = sphi 0, %s51
      %s69 = sphi 0, %s69
      %s71 = sphi 0, %s69
      %s72 = sphi 0, %s71
      %s86 = sphi 0, %s72
      %s90 = sphi 0, %s90
      %s92 = sphi 0, %s90
      %s93 = sphi 0, %s92
      %s107 = sphi 0, %s93
      %s111 = sphi 0, %s111
      %s113 = sphi 0, %s111
      %s114 = sphi 0, %s113
      %s128 = sphi 0, %s114
      %s134 = sphi 0, %s136
      %s137 = sphi 0, %s134
      %s138 = sphi 0, %s137
      %s154 = sphi 0, %s138
    $region4: #{tpu_custom_call.1} parent=1 // loop_header_branch
      %17 = sbr.rel (%p15) target = $region8
    $region5: #{tpu_custom_call.1} parent=1 // loop_body
      %s19 = ssub.s32 %s14, 1
      %s20 = ssub.s32 %s14, 2
      %s21 = sadd.s32 %s14, 1
      %s22 = ssub.s32 %s14, %s21
      %p23 = scmp.eq.s32.totalorder %s22, 0
      %s25 = sadd.s32 %s24, 1
      %s26 = scalar_select %p23, %s24, %s25
      %p29 = pneg %p23
      %p30 = scmp.eq.s32.totalorder %s14, 1
      %p31 = por %p29, %p30
      %p32 = scmp.ne.s32.totalorder %s24, %s27
      %p33 = scmp.eq.s32.totalorder %s14, 0
      %p34 = por %p32, %p33
      %p35 = scmp.ne.s32.totalorder %s24, %s27
      %p36 = scmp.eq.s32.totalorder %s19, 1
      %p37 = por %p35, %p36
      %p38 = scmp.ne.s32.totalorder %s27, %s28
      %p39 = scmp.eq.s32.totalorder %s19, 0
      %p40 = por %p38, %p39
      %p41 = scmp.ne.s32.totalorder %s27, %s28
      %p42 = scmp.eq.s32.totalorder %s20, 1
      %p43 = por %p41, %p42
      %p45 = scmp.ne.s32.totalorder %s28, %s44
      %p46 = scmp.eq.s32.totalorder %s20, 0
      %p47 = por %p45, %p46
      %s49 = sadd.s32 %s48, 1
      %p52 = scmp.eq.s32.totalorder %s14, 1
      %p53 = scmp.ne.s32.totalorder %s48, %s50
      %p54 = scmp.eq.s32.totalorder %s14, 0
      %p55 = por %p53, %p54
      %p56 = scmp.ne.s32.totalorder %s48, %s50
      %p57 = scmp.eq.s32.totalorder %s19, 1
      %p58 = por %p56, %p57
      %p59 = scmp.ne.s32.totalorder %s50, %s51
      %p60 = scmp.eq.s32.totalorder %s19, 0
      %p61 = por %p59, %p60
      %p62 = scmp.ne.s32.totalorder %s50, %s51
      %p63 = scmp.eq.s32.totalorder %s20, 1
      %p64 = por %p62, %p63
      %p66 = scmp.ne.s32.totalorder %s51, %s65
      %p67 = scmp.eq.s32.totalorder %s20, 0
      %p68 = por %p66, %p67
      %s70 = sadd.s32 %s69, 1
      %p73 = scmp.eq.s32.totalorder %s14, 1
      %p74 = scmp.ne.s32.totalorder %s69, %s71
      %p75 = scmp.eq.s32.totalorder %s14, 0
      %p76 = por %p74, %p75
      %p77 = scmp.ne.s32.totalorder %s69, %s71
      %p78 = scmp.eq.s32.totalorder %s19, 1
      %p79 = por %p77, %p78
      %p80 = scmp.ne.s32.totalorder %s71, %s72
      %p81 = scmp.eq.s32.totalorder %s19, 0
      %p82 = por %p80, %p81
      %p83 = scmp.ne.s32.totalorder %s71, %s72
      %p84 = scmp.eq.s32.totalorder %s20, 1
      %p85 = por %p83, %p84
      %p87 = scmp.ne.s32.totalorder %s72, %s86
      %p88 = scmp.eq.s32.totalorder %s20, 0
      %p89 = por %p87, %p88
      %s91 = sadd.s32 %s90, 1
      %p94 = scmp.eq.s32.totalorder %s14, 1
      %p95 = scmp.ne.s32.totalorder %s90, %s92
      %p96 = scmp.eq.s32.totalorder %s14, 0
      %p97 = por %p95, %p96
      %p98 = scmp.ne.s32.totalorder %s90, %s92
      %p99 = scmp.eq.s32.totalorder %s19, 1
      %p100 = por %p98, %p99
      %p101 = scmp.ne.s32.totalorder %s92, %s93
      %p102 = scmp.eq.s32.totalorder %s19, 0
      %p103 = por %p101, %p102
      %p104 = scmp.ne.s32.totalorder %s92, %s93
      %p105 = scmp.eq.s32.totalorder %s20, 1
      %p106 = por %p104, %p105
      %p108 = scmp.ne.s32.totalorder %s93, %s107
      %p109 = scmp.eq.s32.totalorder %s20, 0
      %p110 = por %p108, %p109
      %s112 = sadd.s32 %s111, 1
      %p115 = scmp.eq.s32.totalorder %s14, 1
      %p116 = scmp.ne.s32.totalorder %s111, %s113
      %p117 = scmp.eq.s32.totalorder %s14, 0
      %p118 = por %p116, %p117
      %p119 = scmp.ne.s32.totalorder %s111, %s113
      %p120 = scmp.eq.s32.totalorder %s19, 1
      %p121 = por %p119, %p120
      %p122 = scmp.ne.s32.totalorder %s113, %s114
      %p123 = scmp.eq.s32.totalorder %s19, 0
      %p124 = por %p122, %p123
      %p125 = scmp.ne.s32.totalorder %s113, %s114
      %p126 = scmp.eq.s32.totalorder %s20, 1
      %p127 = por %p125, %p126
      %p129 = scmp.ne.s32.totalorder %s114, %s128
      %p130 = scmp.eq.s32.totalorder %s20, 0
      %p131 = por %p129, %p130
      %s132 = ssub.s32 %s14, %s21
      %p133 = scmp.eq.s32.totalorder %s132, 0
      %s135 = sadd.s32 %s134, 1
      %s136 = scalar_select %p133, %s134, %s135
      %p139 = pneg %p133
      %p140 = scmp.eq.s32.totalorder %s14, 1
      %p141 = por %p139, %p140
      %p142 = scmp.ne.s32.totalorder %s134, %s137
      %p143 = scmp.eq.s32.totalorder %s14, 0
      %p144 = por %p142, %p143
      %p145 = scmp.ne.s32.totalorder %s134, %s137
      %p146 = scmp.eq.s32.totalorder %s19, 1
      %p147 = por %p145, %p146
      %p148 = scmp.ne.s32.totalorder %s137, %s138
      %p149 = scmp.eq.s32.totalorder %s19, 0
      %p150 = por %p148, %p149
      %p151 = scmp.ne.s32.totalorder %s137, %s138
      %p152 = scmp.eq.s32.totalorder %s20, 1
      %p153 = por %p151, %p152
      %p155 = scmp.ne.s32.totalorder %s138, %s154
      %p156 = scmp.eq.s32.totalorder %s20, 0
      %p157 = por %p155, %p156
      %p158 = scmp.le.s32.totalorder 1, %s14
      %p159 = scmp.lt.s32.totalorder %s14, 3
      %p160 = pnand %p158, %p159
      %p161 = pneg %p160
      // Predicated region
      $region9: #{tpu_custom_call.1} parent=5 // pred_check
        _
      $region10: #{tpu_custom_call.1} parent=5 // pred_check_branch
        %163 = sbr.rel (%p160) target = $region12
      $region11: #{tpu_custom_call.1} parent=5 // pred_region
        %s164 = ssub.s32 %s14, 1
        // Predicated region
        $region13: #{tpu_custom_call.1} parent=11 // pred_check
          %p165 = pneg %p61
        $region14: #{tpu_custom_call.1} parent=11 // pred_check_branch
          %167 = sbr.rel (%p165) target = $region16
        $region15: #{tpu_custom_call.1} parent=11 // pred_region
          _
        $region16: #{tpu_custom_call.1} parent=11 // pred_fallthru
          _
        // Predicated region
        $region17: #{tpu_custom_call.1} parent=11 // pred_check
          %p168 = pneg %p82
        $region18: #{tpu_custom_call.1} parent=11 // pred_check_branch
          %170 = sbr.rel (%p168) target = $region20
        $region19: #{tpu_custom_call.1} parent=11 // pred_region
          _
        $region20: #{tpu_custom_call.1} parent=11 // pred_fallthru
          _
        // Predicated region
        $region21: #{tpu_custom_call.1} parent=11 // pred_check
          %p171 = pneg %p103
        $region22: #{tpu_custom_call.1} parent=11 // pred_check_branch
          %173 = sbr.rel (%p171) target = $region24
        $region23: #{tpu_custom_call.1} parent=11 // pred_region
          _
        $region24: #{tpu_custom_call.1} parent=11 // pred_fallthru
          _
        // Predicated region
        $region25: #{tpu_custom_call.1} parent=11 // pred_check
          %p174 = pneg %p124
        $region26: #{tpu_custom_call.1} parent=11 // pred_check_branch
          %176 = sbr.rel (%p174) target = $region28
        $region27: #{tpu_custom_call.1} parent=11 // pred_region
          _
        $region28: #{tpu_custom_call.1} parent=11 // pred_fallthru
          _
      $region12: #{tpu_custom_call.1} parent=5 // pred_fallthru
        _
      %p177 = scmp.lt.s32.totalorder %s14, 2
      // Predicated region
      $region29: #{tpu_custom_call.1} parent=5 // pred_check
        %p178 = pneg %p177
      $region30: #{tpu_custom_call.1} parent=5 // pred_check_branch
        %180 = sbr.rel (%p178) target = $region32
      $region31: #{tpu_custom_call.1} parent=5 // pred_region
        // Predicated region
        $region33: #{tpu_custom_call.1} parent=31 // pred_check
          %p181 = pneg %p34
        $region34: #{tpu_custom_call.1} parent=31 // pred_check_branch
          %183 = sbr.rel (%p181) target = $region36
        $region35: #{tpu_custom_call.1} parent=31 // pred_region
          %s184 = sand.u32 %s24, 1
          %s185 = scalar_lea.sflag [#allocation3], %s184
          %s186 = sand.u32 %s24, 1
          %s187 = smul.addr %s186, 32
          %s188 = scalar_lea.vmem [#allocation2], %s187
          %s190 = ssub.s32 512, 512
          %191 = vsyncadd %s185, %s190
          %s192 = smul.addr %s14, 4
          %s193 = smul.addr %s192, 128
          %s194 = scalar_lea.hbm %s0, %s193
          %s195 = sshll.u32 %s188, 4
          %s196 = int_to_ptr.vmem [resolvable:$true] %s195
          %201 = dma.hbm_to_vmem [thread:$0]  %s194, 512, %s196, %s185, 128, 128, 8
        $region36: #{tpu_custom_call.1} parent=31 // pred_fallthru
          _
      $region32: #{tpu_custom_call.1} parent=5 // pred_fallthru
        _
      %p202 = scmp.le.s32.totalorder 1, %s14
      %p203 = scmp.lt.s32.totalorder %s14, 3
      %p204 = pnand %p202, %p203
      %p205 = pneg %p204
      // Predicated region
      $region37: #{tpu_custom_call.1} parent=5 // pred_check
        _
      $region38: #{tpu_custom_call.1} parent=5 // pred_check_branch
        %207 = sbr.rel (%p204) target = $region40
      $region39: #{tpu_custom_call.1} parent=5 // pred_region
        %s208 = ssub.s32 %s14, 1
        %s209 = sand.u32 %s27, 1
        %s210 = scalar_lea.sflag [#allocation3], %s209
        %s211 = sand.u32 %s27, 1
        %s212 = smul.addr %s211, 32
        %s213 = scalar_lea.vmem [#allocation2], %s212
        // Predicated region
        $region41: #{tpu_custom_call.1} parent=39 // pred_check
          %p214 = pneg %p40
        $region42: #{tpu_custom_call.1} parent=39 // pred_check_branch
          %216 = sbr.rel (%p214) target = $region44
        $region43: #{tpu_custom_call.1} parent=39 // pred_region
          %217 = dma.done %s210, 512
        $region44: #{tpu_custom_call.1} parent=39 // pred_fallthru
          _
        %s218 = sand.u32 %s27, 1
        %s219 = scalar_lea.sflag [#allocation3], %s218
        %s220 = sand.u32 %s27, 1
        %s221 = smul.addr %s220, 32
        %s222 = scalar_lea.vmem [#allocation2], %s221
        %p223 = pneg %p40
        %p224 = pneg %p37
        %p225 = pneg %p61
        %p226 = pneg %p58
        %p227 = pneg %p82
        %p228 = pneg %p79
        %p229 = pneg %p103
        %p230 = pneg %p100
        %p231 = pneg %p124
        %p232 = pneg %p121
        %p233 = pneg %p150
        %p234 = pneg %p147
        %p235 = scmp.lt.s32.totalorder %s19, 1
        %s236 = scalar_select %p235, %s19, 1
        %s237 = smul.addr %s236, 8
        %s238 = scalar_lea.vmem %s5, %s237
        %p239 = scmp.lt.s32.totalorder %s19, 1
        %s240 = scalar_select %p239, %s19, 1
        %s241 = smul.addr %s240, 8
        %s242 = scalar_lea.vmem %s5, %s241
        %v243 = vld [vmem:[%s213] sm:$0xff]
        %v244 = vld [vmem:[%s213 + $0x8] sm:$0xff]
        %v245 = vld [vmem:[%s213 + $0x10] sm:$0xff]
        %v246 = vld [vmem:[%s213 + $0x18] sm:$0xff]
        %v247 = vld [vmem:[%s1] sm:$0xf]
        %v248 = vld [vmem:[%s2] sm:$0x1]
        %v249 = vld [vmem:[%s3] sm:$0x1]
        %v250 = vlaneseq
        %v251 = vand.u32 %v250, 127
        %v253 = vlaneseq
        %v254 = vshrl.u32 %v253, 7
        %v255 = vsub.s32 0, %v254
        %v256 = vrot.slane %v248, %v255
        %vm258 = vcmask 1040384
        %v259 = vsel %vm258, %v247, %v256
        %vm260 = vcmask 261120
        %v262 = vsel %vm260, %v259, 0
        %264 = vmatprep.subr.mxu0 0.0
        %265 = vmatpush1.msra.mxu0 %v243
        %266 = vmatprep.subr.mxu0 0.0
        %267 = vmatpush1.msra.mxu0 %v244
        %268 = vmatprep.subr.mxu0 0.0
        %269 = vmatpush1.msra.mxu0 %v245
        %270 = vmatprep.subr.mxu0 0.0
        %271 = vmatpush1.msra.mxu0 %v246
        %272 = vmatprep.subr.mxu0 0.0
        %273 = vmatpush1.msra.mxu0 0.0
        %274 = vmatprep.subr.mxu0 0.0
        %275 = vmatpush1.msra.mxu0 0.0
        %276 = vmatprep.subr.mxu0 0.0
        %277 = vmatpush1.msra.mxu0 0.0
        %278 = vmatprep.subr.mxu0 0.0
        %279 = vmatpush1.msra.mxu0 0.0
        %280 = vmatprep.subr.mxu0 0.0
        %281 = vmatpush1.msra.mxu0 0.0
        %282 = vmatprep.subr.mxu0 0.0
        %283 = vmatpush1.msra.mxu0 0.0
        %284 = vmatprep.subr.mxu0 0.0
        %285 = vmatpush1.msra.mxu0 0.0
        %286 = vmatprep.subr.mxu0 0.0
        %287 = vmatpush1.msra.mxu0 0.0
        %288 = vmatprep.subr.mxu0 0.0
        %289 = vmatpush1.msra.mxu0 0.0
        %290 = vmatprep.subr.mxu0 0.0
        %291 = vmatpush1.msra.mxu0 0.0
        %292 = vmatprep.subr.mxu0 0.0
        %293 = vmatpush1.msra.mxu0 0.0
        %294 = vmatprep.subr.mxu0 0.0
        %295 = vmatpush1.msra.mxu0 0.0
        %296 = vmatprep.subr.mxu0 0.0
        %297 = vmatpush1.msra.mxu0 0.0
        %298 = vmatprep.subr.mxu0 0.0
        %299 = vmatpush1.msra.mxu0 0.0
        %300 = vmatprep.subr.mxu0 0.0
        %301 = vmatpush1.msra.mxu0 0.0
        %302 = vmatprep.subr.mxu0 0.0
        %303 = vmatpush1.msra.mxu0 0.0
        %304 = vmatprep.subr.mxu0 0.0
        %305 = vmatpush1.msra.mxu0 0.0
        %306 = vmatprep.subr.mxu0 0.0
        %307 = vmatpush1.msra.mxu0 0.0
        %308 = vmatprep.subr.mxu0 0.0
        %309 = vmatpush1.msra.mxu0 0.0
        %310 = vmatprep.subr.mxu0 0.0
        %311 = vmatpush1.msra.mxu0 0.0
        %312 = vmatprep.subr.mxu0 0.0
        %313 = vmatpush1.msra.mxu0 0.0
        %314 = vmatprep.subr.mxu0 0.0
        %315 = vmatpush1.msra.mxu0 0.0
        %316 = vmatprep.subr.mxu0 0.0
        %317 = vmatpush1.msra.mxu0 0.0
        %318 = vmatprep.subr.mxu0 0.0
        %319 = vmatpush1.msra.mxu0 0.0
        %320 = vmatprep.subr.mxu0 0.0
        %321 = vmatpush1.msra.mxu0 0.0
        %322 = vmatprep.subr.mxu0 0.0
        %323 = vmatpush1.msra.mxu0 0.0
        %324 = vmatprep.subr.mxu0 0.0
        %325 = vmatpush1.msra.mxu0 0.0
        %326 = vmatprep.subr.mxu0 0.0
        %327 = vmatpush1.msra.mxu0 0.0
        %328 = vmatprep.mubr.f32.mxu0 0.0
        %329 = vmatmul.mubr.f32.gmra.mrb[0].mxu0 %v262
        %v330 = vpop.f32.mrb[0].mxu0
        %v331 = vadd.f32 0.0, %v330
        %v332 = vpop.f32.mrb[0].mxu0
        %333 = vdwg.mxu0
        %334 = vrot.lane.b32.xlu0 %v243, 1
        %v335 = vpop.permute.xlu0 %334
        %336 = vrot.lane.b32.xlu0 %v244, 1
        %v337 = vpop.permute.xlu0 %336
        %338 = vrot.lane.b32.xlu0 %v245, 1
        %v339 = vpop.permute.xlu0 %338
        %340 = vrot.lane.b32.xlu0 %v246, 1
        %v341 = vpop.permute.xlu0 %340
        %vm342 = vcmp.ge.s32.totalorder %v251, 1
        %v343 = vsel %vm342, %v335, 0.0
        %v344 = vsel %vm342, %v337, 0.0
        %v345 = vsel %vm342, %v339, 0.0
        %v346 = vsel %vm342, %v341, 0.0
        %v347 = vmax.f32 %v243, %v343
        %v348 = vmax.f32 %v244, %v344
        %v349 = vmax.f32 %v245, %v345
        %v350 = vmax.f32 %v246, %v346
        %v352 = vrot.slane %v247, 1
        %v353 = vsel %vm260, %v352, 0
        %355 = vmatprep.subr.mxu0 0.0
        %356 = vmatpush1.msra.mxu0 %v347
        %357 = vmatprep.subr.mxu0 0.0
        %358 = vmatpush1.msra.mxu0 %v348
        %359 = vmatprep.subr.mxu0 0.0
        %360 = vmatpush1.msra.mxu0 %v349
        %361 = vmatprep.subr.mxu0 0.0
        %362 = vmatpush1.msra.mxu0 %v350
        %363 = vmatprep.subr.mxu0 0.0
        %364 = vmatpush1.msra.mxu0 0.0
        %365 = vmatprep.subr.mxu0 0.0
        %366 = vmatpush1.msra.mxu0 0.0
        %367 = vmatprep.subr.mxu0 0.0
        %368 = vmatpush1.msra.mxu0 0.0
        %369 = vmatprep.subr.mxu0 0.0
        %370 = vmatpush1.msra.mxu0 0.0
        %371 = vmatprep.subr.mxu0 0.0
        %372 = vmatpush1.msra.mxu0 0.0
        %373 = vmatprep.subr.mxu0 0.0
        %374 = vmatpush1.msra.mxu0 0.0
        %375 = vmatprep.subr.mxu0 0.0
        %376 = vmatpush1.msra.mxu0 0.0
        %377 = vmatprep.subr.mxu0 0.0
        %378 = vmatpush1.msra.mxu0 0.0
        %379 = vmatprep.subr.mxu0 0.0
        %380 = vmatpush1.msra.mxu0 0.0
        %381 = vmatprep.subr.mxu0 0.0
        %382 = vmatpush1.msra.mxu0 0.0
        %383 = vmatprep.subr.mxu0 0.0
        %384 = vmatpush1.msra.mxu0 0.0
        %385 = vmatprep.subr.mxu0 0.0
        %386 = vmatpush1.msra.mxu0 0.0
        %387 = vmatprep.subr.mxu0 0.0
        %388 = vmatpush1.msra.mxu0 0.0
        %389 = vmatprep.subr.mxu0 0.0
        %390 = vmatpush1.msra.mxu0 0.0
        %391 = vmatprep.subr.mxu0 0.0
        %392 = vmatpush1.msra.mxu0 0.0
        %393 = vmatprep.subr.mxu0 0.0
        %394 = vmatpush1.msra.mxu0 0.0
        %395 = vmatprep.subr.mxu0 0.0
        %396 = vmatpush1.msra.mxu0 0.0
        %397 = vmatprep.subr.mxu0 0.0
        %398 = vmatpush1.msra.mxu0 0.0
        %399 = vmatprep.subr.mxu0 0.0
        %400 = vmatpush1.msra.mxu0 0.0
        %401 = vmatprep.subr.mxu0 0.0
        %402 = vmatpush1.msra.mxu0 0.0
        %403 = vmatprep.subr.mxu0 0.0
        %404 = vmatpush1.msra.mxu0 0.0
        %405 = vmatprep.subr.mxu0 0.0
        %406 = vmatpush1.msra.mxu0 0.0
        %407 = vmatprep.subr.mxu0 0.0
        %408 = vmatpush1.msra.mxu0 0.0
        %409 = vmatprep.subr.mxu0 0.0
        %410 = vmatpush1.msra.mxu0 0.0
        %411 = vmatprep.subr.mxu0 0.0
        %412 = vmatpush1.msra.mxu0 0.0
        %413 = vmatprep.subr.mxu0 0.0
        %414 = vmatpush1.msra.mxu0 0.0
        %415 = vmatprep.subr.mxu0 0.0
        %416 = vmatpush1.msra.mxu0 0.0
        %417 = vmatprep.subr.mxu0 0.0
        %418 = vmatpush1.msra.mxu0 0.0
        %419 = vmatprep.mubr.f32.mxu0 0.0
        %420 = vmatmul.mubr.f32.gmra.mrb[0].mxu0 %v353
        %v421 = vpop.f32.mrb[0].mxu0
        %v422 = vadd.f32 0.0, %v421
        %v423 = vpop.f32.mrb[0].mxu0
        %424 = vdwg.mxu0
        %425 = vrot.lane.b32.xlu0 %v243, 2
        %v426 = vpop.permute.xlu0 %425
        %427 = vrot.lane.b32.xlu0 %v244, 2
        %v428 = vpop.permute.xlu0 %427
        %429 = vrot.lane.b32.xlu0 %v245, 2
        %v430 = vpop.permute.xlu0 %429
        %431 = vrot.lane.b32.xlu0 %v246, 2
        %v432 = vpop.permute.xlu0 %431
        %vm433 = vcmp.ge.s32.totalorder %v251, 2
        %v434 = vsel %vm433, %v426, 0.0
        %v435 = vsel %vm433, %v428, 0.0
        %v436 = vsel %vm433, %v430, 0.0
        %v437 = vsel %vm433, %v432, 0.0
        %v438 = vmax.f32 %v243, %v434
        %v439 = vmax.f32 %v244, %v435
        %v440 = vmax.f32 %v245, %v436
        %v441 = vmax.f32 %v246, %v437
        %v442 = vrot.slane %v247, 2
        %v443 = vsel %vm260, %v442, 0
        %445 = vmatprep.subr.mxu0 0.0
        %446 = vmatpush1.msra.mxu0 %v438
        %447 = vmatprep.subr.mxu0 0.0
        %448 = vmatpush1.msra.mxu0 %v439
        %449 = vmatprep.subr.mxu0 0.0
        %450 = vmatpush1.msra.mxu0 %v440
        %451 = vmatprep.subr.mxu0 0.0
        %452 = vmatpush1.msra.mxu0 %v441
        %453 = vmatprep.subr.mxu0 0.0
        %454 = vmatpush1.msra.mxu0 0.0
        %455 = vmatprep.subr.mxu0 0.0
        %456 = vmatpush1.msra.mxu0 0.0
        %457 = vmatprep.subr.mxu0 0.0
        %458 = vmatpush1.msra.mxu0 0.0
        %459 = vmatprep.subr.mxu0 0.0
        %460 = vmatpush1.msra.mxu0 0.0
        %461 = vmatprep.subr.mxu0 0.0
        %462 = vmatpush1.msra.mxu0 0.0
        %463 = vmatprep.subr.mxu0 0.0
        %464 = vmatpush1.msra.mxu0 0.0
        %465 = vmatprep.subr.mxu0 0.0
        %466 = vmatpush1.msra.mxu0 0.0
        %467 = vmatprep.subr.mxu0 0.0
        %468 = vmatpush1.msra.mxu0 0.0
        %469 = vmatprep.subr.mxu0 0.0
        %470 = vmatpush1.msra.mxu0 0.0
        %471 = vmatprep.subr.mxu0 0.0
        %472 = vmatpush1.msra.mxu0 0.0
        %473 = vmatprep.subr.mxu0 0.0
        %474 = vmatpush1.msra.mxu0 0.0
        %475 = vmatprep.subr.mxu0 0.0
        %476 = vmatpush1.msra.mxu0 0.0
        %477 = vmatprep.subr.mxu0 0.0
        %478 = vmatpush1.msra.mxu0 0.0
        %479 = vmatprep.subr.mxu0 0.0
        %480 = vmatpush1.msra.mxu0 0.0
        %481 = vmatprep.subr.mxu0 0.0
        %482 = vmatpush1.msra.mxu0 0.0
        %483 = vmatprep.subr.mxu0 0.0
        %484 = vmatpush1.msra.mxu0 0.0
        %485 = vmatprep.subr.mxu0 0.0
        %486 = vmatpush1.msra.mxu0 0.0
        %487 = vmatprep.subr.mxu0 0.0
        %488 = vmatpush1.msra.mxu0 0.0
        %489 = vmatprep.subr.mxu0 0.0
        %490 = vmatpush1.msra.mxu0 0.0
        %491 = vmatprep.subr.mxu0 0.0
        %492 = vmatpush1.msra.mxu0 0.0
        %493 = vmatprep.subr.mxu0 0.0
        %494 = vmatpush1.msra.mxu0 0.0
        %495 = vmatprep.subr.mxu0 0.0
        %496 = vmatpush1.msra.mxu0 0.0
        %497 = vmatprep.subr.mxu0 0.0
        %498 = vmatpush1.msra.mxu0 0.0
        %499 = vmatprep.subr.mxu0 0.0
        %500 = vmatpush1.msra.mxu0 0.0
        %501 = vmatprep.subr.mxu0 0.0
        %502 = vmatpush1.msra.mxu0 0.0
        %503 = vmatprep.subr.mxu0 0.0
        %504 = vmatpush1.msra.mxu0 0.0
        %505 = vmatprep.subr.mxu0 0.0
        %506 = vmatpush1.msra.mxu0 0.0
        %507 = vmatprep.subr.mxu0 0.0
        %508 = vmatpush1.msra.mxu0 0.0
        %509 = vmatprep.mubr.f32.mxu0 0.0
        %510 = vmatmul.mubr.f32.gmra.mrb[0].mxu0 %v443
        %v511 = vpop.f32.mrb[0].mxu0
        %v512 = vadd.f32 0.0, %v511
        %v513 = vpop.f32.mrb[0].mxu0
        %514 = vdwg.mxu0
        %515 = vrot.lane.b32.xlu0 %v243, 3
        %v516 = vpop.permute.xlu0 %515
        %517 = vrot.lane.b32.xlu0 %v244, 3
        %v518 = vpop.permute.xlu0 %517
        %519 = vrot.lane.b32.xlu0 %v245, 3
        %v520 = vpop.permute.xlu0 %519
        %521 = vrot.lane.b32.xlu0 %v246, 3
        %v522 = vpop.permute.xlu0 %521
        %vm523 = vcmp.ge.s32.totalorder %v251, 3
        %v524 = vsel %vm523, %v516, 0.0
        %v525 = vsel %vm523, %v518, 0.0
        %v526 = vsel %vm523, %v520, 0.0
        %v527 = vsel %vm523, %v522, 0.0
        %v528 = vmax.f32 %v243, %v524
        %v529 = vmax.f32 %v244, %v525
        %v530 = vmax.f32 %v245, %v526
        %v531 = vmax.f32 %v246, %v527
        %v532 = vrot.slane %v247, 3
        %v533 = vsel %vm260, %v532, 0
        %535 = vmatprep.subr.mxu0 0.0
        %536 = vmatpush1.msra.mxu0 %v528
        %537 = vmatprep.subr.mxu0 0.0
        %538 = vmatpush1.msra.mxu0 %v529
        %539 = vmatprep.subr.mxu0 0.0
        %540 = vmatpush1.msra.mxu0 %v530
        %541 = vmatprep.subr.mxu0 0.0
        %542 = vmatpush1.msra.mxu0 %v531
        %543 = vmatprep.subr.mxu0 0.0
        %544 = vmatpush1.msra.mxu0 0.0
        %545 = vmatprep.subr.mxu0 0.0
        %546 = vmatpush1.msra.mxu0 0.0
        %547 = vmatprep.subr.mxu0 0.0
        %548 = vmatpush1.msra.mxu0 0.0
        %549 = vmatprep.subr.mxu0 0.0
        %550 = vmatpush1.msra.mxu0 0.0
        %551 = vmatprep.subr.mxu0 0.0
        %552 = vmatpush1.msra.mxu0 0.0
        %553 = vmatprep.subr.mxu0 0.0
        %554 = vmatpush1.msra.mxu0 0.0
        %555 = vmatprep.subr.mxu0 0.0
        %556 = vmatpush1.msra.mxu0 0.0
        %557 = vmatprep.subr.mxu0 0.0
        %558 = vmatpush1.msra.mxu0 0.0
        %559 = vmatprep.subr.mxu0 0.0
        %560 = vmatpush1.msra.mxu0 0.0
        %561 = vmatprep.subr.mxu0 0.0
        %562 = vmatpush1.msra.mxu0 0.0
        %563 = vmatprep.subr.mxu0 0.0
        %564 = vmatpush1.msra.mxu0 0.0
        %565 = vmatprep.subr.mxu0 0.0
        %566 = vmatpush1.msra.mxu0 0.0
        %567 = vmatprep.subr.mxu0 0.0
        %568 = vmatpush1.msra.mxu0 0.0
        %569 = vmatprep.subr.mxu0 0.0
        %570 = vmatpush1.msra.mxu0 0.0
        %571 = vmatprep.subr.mxu0 0.0
        %572 = vmatpush1.msra.mxu0 0.0
        %573 = vmatprep.subr.mxu0 0.0
        %574 = vmatpush1.msra.mxu0 0.0
        %575 = vmatprep.subr.mxu0 0.0
        %576 = vmatpush1.msra.mxu0 0.0
        %577 = vmatprep.subr.mxu0 0.0
        %578 = vmatpush1.msra.mxu0 0.0
        %579 = vmatprep.subr.mxu0 0.0
        %580 = vmatpush1.msra.mxu0 0.0
        %581 = vmatprep.subr.mxu0 0.0
        %582 = vmatpush1.msra.mxu0 0.0
        %583 = vmatprep.subr.mxu0 0.0
        %584 = vmatpush1.msra.mxu0 0.0
        %585 = vmatprep.subr.mxu0 0.0
        %586 = vmatpush1.msra.mxu0 0.0
        %587 = vmatprep.subr.mxu0 0.0
        %588 = vmatpush1.msra.mxu0 0.0
        %589 = vmatprep.subr.mxu0 0.0
        %590 = vmatpush1.msra.mxu0 0.0
        %591 = vmatprep.subr.mxu0 0.0
        %592 = vmatpush1.msra.mxu0 0.0
        %593 = vmatprep.subr.mxu0 0.0
        %594 = vmatpush1.msra.mxu0 0.0
        %595 = vmatprep.subr.mxu0 0.0
        %596 = vmatpush1.msra.mxu0 0.0
        %597 = vmatprep.subr.mxu0 0.0
        %598 = vmatpush1.msra.mxu0 0.0
        %599 = vmatprep.mubr.f32.mxu0 0.0
        %600 = vmatmul.mubr.f32.gmra.mrb[0].mxu0 %v533
        %v601 = vpop.f32.mrb[0].mxu0
        %v602 = vadd.f32 0.0, %v601
        %v603 = vpop.f32.mrb[0].mxu0
        %604 = vdwg.mxu0
        %v606 = vrot.slane %v422, 7
        %v609 = vrot.slane %v512, 6
        %v612 = vrot.slane %v602, 5
        %v614 = vsel %vm258, %v331, %v606
        %vm615 = vcmask 1041408
        %v616 = vsel %vm615, %v614, %v609
        %vm617 = vcmask 1042432
        %v618 = vsel %vm617, %v616, %v612
        %v619 = vlaneseq
        %v620 = vshrl.u32 %v619, 7
        %v621 = vsub.s32 1, %v620
        %v622 = vrot.slane %v331, %v621
        %v623 = vadd.f32 %v618, %v622
        %624 = vrot.lane.b32.xlu0 %v243, 124
        %v625 = vpop.permute.xlu0 %624
        %626 = vrot.lane.b32.xlu0 %v244, 124
        %v627 = vpop.permute.xlu0 %626
        %628 = vrot.lane.b32.xlu0 %v245, 124
        %v629 = vpop.permute.xlu0 %628
        %630 = vrot.lane.b32.xlu0 %v246, 124
        %v631 = vpop.permute.xlu0 %630
        %vm632 = vcmp.lt.s32.totalorder %v251, 4
        %v633 = vsel %vm632, %v625, 0.0
        %v634 = vsel %vm632, %v627, 0.0
        %v635 = vsel %vm632, %v629, 0.0
        %v636 = vsel %vm632, %v631, 0.0
        %v637 = vmax.f32 %v243, %v633
        %v638 = vmax.f32 %v244, %v634
        %v639 = vmax.f32 %v245, %v635
        %v640 = vmax.f32 %v246, %v636
        %v642 = vsel %vm260, %v249, 0
        %644 = vmatprep.subr.mxu0 0.0
        %645 = vmatpush1.msra.mxu0 %v637
        %646 = vmatprep.subr.mxu0 0.0
        %647 = vmatpush1.msra.mxu0 %v638
        %648 = vmatprep.subr.mxu0 0.0
        %649 = vmatpush1.msra.mxu0 %v639
        %650 = vmatprep.subr.mxu0 0.0
        %651 = vmatpush1.msra.mxu0 %v640
        %652 = vmatprep.subr.mxu0 0.0
        %653 = vmatpush1.msra.mxu0 0.0
        %654 = vmatprep.subr.mxu0 0.0
        %655 = vmatpush1.msra.mxu0 0.0
        %656 = vmatprep.subr.mxu0 0.0
        %657 = vmatpush1.msra.mxu0 0.0
        %658 = vmatprep.subr.mxu0 0.0
        %659 = vmatpush1.msra.mxu0 0.0
        %660 = vmatprep.subr.mxu0 0.0
        %661 = vmatpush1.msra.mxu0 0.0
        %662 = vmatprep.subr.mxu0 0.0
        %663 = vmatpush1.msra.mxu0 0.0
        %664 = vmatprep.subr.mxu0 0.0
        %665 = vmatpush1.msra.mxu0 0.0
        %666 = vmatprep.subr.mxu0 0.0
        %667 = vmatpush1.msra.mxu0 0.0
        %668 = vmatprep.subr.mxu0 0.0
        %669 = vmatpush1.msra.mxu0 0.0
        %670 = vmatprep.subr.mxu0 0.0
        %671 = vmatpush1.msra.mxu0 0.0
        %672 = vmatprep.subr.mxu0 0.0
        %673 = vmatpush1.msra.mxu0 0.0
        %674 = vmatprep.subr.mxu0 0.0
        %675 = vmatpush1.msra.mxu0 0.0
        %676 = vmatprep.subr.mxu0 0.0
        %677 = vmatpush1.msra.mxu0 0.0
        %678 = vmatprep.subr.mxu0 0.0
        %679 = vmatpush1.msra.mxu0 0.0
        %680 = vmatprep.subr.mxu0 0.0
        %681 = vmatpush1.msra.mxu0 0.0
        %682 = vmatprep.subr.mxu0 0.0
        %683 = vmatpush1.msra.mxu0 0.0
        %684 = vmatprep.subr.mxu0 0.0
        %685 = vmatpush1.msra.mxu0 0.0
        %686 = vmatprep.subr.mxu0 0.0
        %687 = vmatpush1.msra.mxu0 0.0
        %688 = vmatprep.subr.mxu0 0.0
        %689 = vmatpush1.msra.mxu0 0.0
        %690 = vmatprep.subr.mxu0 0.0
        %691 = vmatpush1.msra.mxu0 0.0
        %692 = vmatprep.subr.mxu0 0.0
        %693 = vmatpush1.msra.mxu0 0.0
        %694 = vmatprep.subr.mxu0 0.0
        %695 = vmatpush1.msra.mxu0 0.0
        %696 = vmatprep.subr.mxu0 0.0
        %697 = vmatpush1.msra.mxu0 0.0
        %698 = vmatprep.subr.mxu0 0.0
        %699 = vmatpush1.msra.mxu0 0.0
        %700 = vmatprep.subr.mxu0 0.0
        %701 = vmatpush1.msra.mxu0 0.0
        %702 = vmatprep.subr.mxu0 0.0
        %703 = vmatpush1.msra.mxu0 0.0
        %704 = vmatprep.subr.mxu0 0.0
        %705 = vmatpush1.msra.mxu0 0.0
        %706 = vmatprep.subr.mxu0 0.0
        %707 = vmatpush1.msra.mxu0 0.0
        %708 = vmatprep.mubr.f32.mxu0 0.0
        %709 = vmatmul.mubr.f32.gmra.mrb[0].mxu0 %v642
        %v710 = vpop.f32.mrb[0].mxu0
        %v711 = vadd.f32 0.0, %v710
        %v712 = vpop.f32.mrb[0].mxu0
        %713 = vdwg.mxu0
        %v715 = vrot.slane %v711, 4
        %vm717 = vcmask 1043456
        %v718 = vsel %vm717, %v623, %v715
        %v719 = vld [vmem:[%s4] sm:$0x1f]
        %721 = vset.pattern.permute.xlu0 0
        %722 = vperm.xlu0 %721, %v719
        %v723 = vpop.permute.xlu0 %722
        %v725 = vadd.f32 %v718, %v723
        %726 = vst [vmem:[%s242] sm:$0x1f] %v725
        %p727 = scmp.lt.s32.totalorder %s19, 1
        %s728 = scalar_select %p727, %s19, 1
        %s729 = smul.addr %s728, 8
        %s730 = scalar_lea.vmem %s5, %s729
        // Predicated region
        $region45: #{tpu_custom_call.1} parent=39 // pred_check
          %p731 = pneg %p147
        $region46: #{tpu_custom_call.1} parent=39 // pred_check_branch
          %733 = sbr.rel (%p731) target = $region48
        $region47: #{tpu_custom_call.1} parent=39 // pred_region
          _
        $region48: #{tpu_custom_call.1} parent=39 // pred_fallthru
          _
      $region40: #{tpu_custom_call.1} parent=5 // pred_fallthru
        _
      %p734 = scmp.le.s32.totalorder 2, %s14
      // Predicated region
      $region49: #{tpu_custom_call.1} parent=5 // pred_check
        %p735 = pneg %p734
      $region50: #{tpu_custom_call.1} parent=5 // pred_check_branch
        %737 = sbr.rel (%p735) target = $region52
      $region51: #{tpu_custom_call.1} parent=5 // pred_region
        %s738 = ssub.s32 %s14, 2
        // Predicated region
        $region53: #{tpu_custom_call.1} parent=51 // pred_check
          %p739 = pneg %p153
        $region54: #{tpu_custom_call.1} parent=51 // pred_check_branch
          %741 = sbr.rel (%p739) target = $region56
        $region55: #{tpu_custom_call.1} parent=51 // pred_region
          %p742 = scmp.lt.s32.totalorder %s20, 1
          %s743 = scalar_select %p742, %s20, 1
          %s744 = smul.addr %s743, 8
          %s745 = scalar_lea.vmem %s5, %s744
        $region56: #{tpu_custom_call.1} parent=51 // pred_fallthru
          _
      $region52: #{tpu_custom_call.1} parent=5 // pred_fallthru
        _
    $region6: #{tpu_custom_call.1} parent=1 // loop_footer
      %s18 = sadd.s32 1, %s14
    $region7: #{tpu_custom_call.1} parent=1 // loop_footer_branch
      %13 = sbr.rel target = $region3
    $region8: #{tpu_custom_call.1} parent=1 // loop_exit
      _
    %746 = vsyncpa [#allocation3], 1
    %s747 = scalar_lea.sflag [#allocation3], 1
    %748 = vsyncpa %s747, 1

</llo_original>
